<compile_context>
chip_gen: v7x
topology: tpu7x:2x2x1
jax: 0.10.0
libtpu: 0.0.40
codegen_flags: <defaults>
</compile_context>

<pallas_src>
import functools

import jax
import jax.numpy as jnp
from jax.experimental import pallas as pl
from jax.experimental.pallas import tpu as pltpu


def _double_delta_kernel(x_ref, o_ref, *, win_length, t_valid):
    """x_ref: (F_TILE, T_pad) input tile (columns >= t_valid are undefined);
    o_ref: (3, F_TILE, t_valid) output tile [specgram, delta, double-delta]."""
    N = (win_length - 1) // 2
    denom_inv = 1.0 / (2.0 * sum(float(n * n) for n in range(1, N + 1)))

    x = x_ref[...]                                  # input dtype, (F_TILE, T_pad)
    xf = x.astype(jnp.float32)                      # f32 accumulation
    T_pad = xf.shape[-1]
    axis = xf.ndim - 1

    # Edge-handling masks are identical for both delta passes -> compute once.
    t_idx = jax.lax.broadcasted_iota(jnp.int32, xf.shape, dimension=axis)
    plus_masks = [t_idx < (t_valid - n) for n in range(1, N + 1)]
    minus_masks = [t_idx >= n for n in range(1, N + 1)]

    def compute_delta(c):
        # Replicate-edge columns broadcast once per pass (not per tap).
        left_b = jnp.broadcast_to(c[..., 0:1], c.shape)                    # c_0
        right_b = jnp.broadcast_to(c[..., t_valid - 1:t_valid], c.shape)   # c_{T-1}
        acc = jnp.zeros_like(c)
        for n in range(1, N + 1):
            # c_{t+n}: roll left by n (shift T_pad-n keeps it non-negative);
            # replicate the right edge for t >= t_valid - n.
            plus = jnp.where(plus_masks[n - 1],
                             pltpu.roll(c, T_pad - n, axis=axis), right_b)
            # c_{t-n}: roll right by n; replicate the left edge for t < n.
            minus = jnp.where(minus_masks[n - 1],
                              pltpu.roll(c, n, axis=axis), left_b)
            acc = acc + float(n) * (plus - minus)
        return acc * denom_inv

    d = compute_delta(xf)
    dd = compute_delta(d)

    # Only the valid [0, t_valid) columns are written (masked store on the
    # final <128-lane group when t_valid % 128 != 0).
    o_ref[0] = x[..., :t_valid]
    o_ref[1] = d[..., :t_valid].astype(o_ref.dtype)
    o_ref[2] = dd[..., :t_valid].astype(o_ref.dtype)


# Per-step VMEM cap (double-buffered in/out blocks + f32 intermediates).
# Leaves headroom under v7x's 64 MiB/TC physical VMEM; well inside v5e/v6e.
_VMEM_CAP_BYTES = 40 * 1024 * 1024
_OUT_BLOCK_TARGET = 8 * 1024 * 1024     # per-step output block target (sweepable)
_VMEM_LIMIT_BYTES = 48 * 1024 * 1024    # explicit scoped-VMEM limit
_MIN_GRID_STEPS = 8                     # keep megacore (2 TCs) + pipeline fed


def _pick_f_tile(F, T_pad, dtype, batch):
    """Largest divisor of F, rounded to the dtype's native sublane packing,
    that (a) keeps per-step VMEM (2x in, 2x out, f32 temps) under the cap,
    (b) keeps the output block near the multi-MiB sweet spot, and (c) leaves
    enough grid steps for both TensorCores and pipeline depth."""
    itemsize = jnp.dtype(dtype).itemsize
    sub = {4: 8, 2: 16, 1: 32}.get(itemsize, 8)     # dtype-aware sublane packing
    if F % sub != 0:
        return F                                    # full-extent block is always legal

    def vmem_bytes(ft):
        io = (2 * ft * T_pad + 2 * 3 * ft * T_pad) * itemsize   # double-buffered in/out
        f32_tmp = 8 * ft * T_pad * 4                            # xf, d, dd, acc, temps, masks
        return io + f32_tmp

    max_steps = batch * (F // sub)
    min_steps = min(_MIN_GRID_STEPS, max_steps)

    tile = sub
    # TODO(synk): time-tiled inner pipeline (N-column halo) for very long T
    # where even the minimal F tile exceeds the VMEM cap.
    for cand in range(sub, F + 1, sub):
        if F % cand != 0:
            continue
        if vmem_bytes(cand) > _VMEM_CAP_BYTES:
            continue
        if 3 * cand * T_pad * itemsize > _OUT_BLOCK_TARGET:
            continue
        if batch * (F // cand) < min_steps:
            continue
        tile = cand
    return tile


def double_delta_transform(x, win_length: int = 5):
    """x: (B, F, T) -> (B, 3*F, T); matches DoubleDeltaTransform.forward
    (ComputeDeltas twice with mode='replicate', then torch.hstack)."""
    if win_length < 3:
        raise ValueError("win_length must be >= 3")
    B, F, T = x.shape
    itemsize = jnp.dtype(x.dtype).itemsize

    # 128-aligned block width for the input so in-kernel rolls stay on a
    # lane-aligned axis; no HBM pad is materialized (partial last block).
    T_pad = ((T + 127) // 128) * 128
    F_TILE = _pick_f_tile(F, T_pad, x.dtype, B)
    grid = (B, F // F_TILE)

    kernel = functools.partial(_double_delta_kernel,
                               win_length=win_length, t_valid=T)

    N = (win_length - 1) // 2
    cost = pl.CostEstimate(
        flops=2 * (3 * N + 1) * B * F * T,          # two N-tap FIR passes
        transcendentals=0,
        bytes_accessed=4 * B * F * T * itemsize)    # read F*T, write 3*F*T

    out = pl.pallas_call(
        kernel,
        out_shape=jax.ShapeDtypeStruct((B, 3, F, T), x.dtype),
        grid=grid,
        in_specs=[pl.BlockSpec((pl.Squeezed(), F_TILE, T_pad),
                               lambda b, f: (b, f, 0))],
        out_specs=pl.BlockSpec((pl.Squeezed(), 3, F_TILE, T),
                               lambda b, f: (b, 0, f, 0)),
        compiler_params=pltpu.CompilerParams(
            dimension_semantics=("parallel", "parallel"),
            vmem_limit_bytes=_VMEM_LIMIT_BYTES),
        cost_estimate=cost,
    )(x)

    # (B, 3, F, T) -> (B, 3F, T): pure metadata reshape, identical memory
    # layout to torch.hstack along the freq axis. No slice, no copy.
    return out.reshape(B, 3 * F, T)


def _reference(x, win_length: int = 5):
    """Pure-JAX reference: ComputeDeltas applied twice + stack along freq."""
    N = (win_length - 1) // 2
    denom = 2.0 * sum(float(n * n) for n in range(1, N + 1))

    def delta(c):
        T = c.shape[-1]
        cp = jnp.pad(c, ((0, 0), (0, 0), (N, N)), mode="edge")
        out = jnp.zeros_like(c)
        for n in range(1, N + 1):
            out = out + float(n) * (cp[..., N + n:N + n + T] -
                                    cp[..., N - n:N - n + T])
        return out / denom

    d = delta(x)
    dd = delta(d)
    return jnp.concatenate([x, d, dd], axis=1)


if __name__ == "__main__":
    key = jax.random.PRNGKey(0)
    B, F, T = 2, 16, 50          # small, non-128-aligned T exercises the
                                 # partial input block + masked output stores
    x = jax.random.normal(key, (B, F, T), dtype=jnp.float32)

    out = jax.block_until_ready(double_delta_transform(x, win_length=5))
    ref = _reference(x, win_length=5)

    assert out.shape == (B, 3 * F, T), out.shape
    assert jnp.allclose(out, ref, atol=1e-5, rtol=1e-5), \
        float(jnp.max(jnp.abs(out - ref)))
    print("KERNEL_OK")
</pallas_src>

<mosaic_0001>
module attributes {stable_mosaic.version = 11 : i64} {
  func.func @_double_delta_kernel(%arg0: i32, %arg1: i32, %arg2: memref<1x8x128xf32, #tpu.memory_space<vmem>>, %arg3: memref<1x3x8x50xf32, #tpu.memory_space<vmem>>) attributes {dimension_semantics = [#tpu.dimension_semantics<parallel>, #tpu.dimension_semantics<parallel>], iteration_bounds = array<i64: 2, 2>, scalar_prefetch = 0 : i64, scratch_operands = 0 : i64, tpu.core_type = #tpu.core_type<tc>, window_params = [{transform_indices = @transform_0, window_bounds = array<i64: 1, 8, 128>}, {transform_indices = @transform_1, window_bounds = array<i64: 1, 3, 8, 50>}]} {
    %c0 = arith.constant 0 : index
    %c0_0 = arith.constant 0 : index
    %c0_1 = arith.constant 0 : index
    %0 = vector.load %arg2[%c0, %c0_0, %c0_1] : memref<1x8x128xf32, #tpu.memory_space<vmem>>, vector<1x8x128xf32>
    %1 = vector.shape_cast %0 : vector<1x8x128xf32> to vector<8x128xf32>
    %2 = tpu.iota {dimensions = array<i32: 1>} : vector<8x128xi32>
    %c49_i32 = arith.constant 49 : i32
    %3 = vector.broadcast %c49_i32 : i32 to vector<8x128xi32>
    %4 = arith.cmpi slt, %2, %3 : vector<8x128xi32>
    %c48_i32 = arith.constant 48 : i32
    %5 = vector.broadcast %c48_i32 : i32 to vector<8x128xi32>
    %6 = arith.cmpi slt, %2, %5 : vector<8x128xi32>
    %c1_i32 = arith.constant 1 : i32
    %7 = vector.broadcast %c1_i32 : i32 to vector<8x128xi32>
    %8 = arith.cmpi sge, %2, %7 : vector<8x128xi32>
    %c2_i32 = arith.constant 2 : i32
    %9 = vector.broadcast %c2_i32 : i32 to vector<8x128xi32>
    %10 = arith.cmpi sge, %2, %9 : vector<8x128xi32>
    %11 = vector.extract_strided_slice %1 {offsets = [0, 0], sizes = [8, 1], strides = [1, 1]} : vector<8x128xf32> to vector<8x1xf32>
    %12 = vector.shape_cast %11 : vector<8x1xf32> to vector<8x1xf32>
    %13 = vector.broadcast %12 : vector<8x1xf32> to vector<8x128xf32>
    %14 = vector.extract_strided_slice %1 {offsets = [0, 49], sizes = [8, 1], strides = [1, 1]} : vector<8x128xf32> to vector<8x1xf32>
    %15 = vector.shape_cast %14 : vector<8x1xf32> to vector<8x1xf32>
    %16 = vector.broadcast %15 : vector<8x1xf32> to vector<8x128xf32>
    %cst = arith.constant 0.000000e+00 : f32
    %17 = vector.broadcast %cst : f32 to vector<8x128xf32>
    %c127_i32 = arith.constant 127 : i32
    %18 = tpu.dynamic_rotate %1 by %c127_i32 dim 1 : vector<8x128xf32>, i32 -> vector<8x128xf32>
    %19 = arith.select %4, %18, %16 : vector<8x128xi1>, vector<8x128xf32>
    %c1_i32_2 = arith.constant 1 : i32
    %20 = tpu.dynamic_rotate %1 by %c1_i32_2 dim 1 : vector<8x128xf32>, i32 -> vector<8x128xf32>
    %21 = arith.select %8, %20, %13 : vector<8x128xi1>, vector<8x128xf32>
    %22 = arith.subf %19, %21 : vector<8x128xf32>
    %cst_3 = arith.constant 1.000000e+00 : f32
    %23 = vector.broadcast %cst_3 : f32 to vector<8x128xf32>
    %24 = arith.mulf %23, %22 : vector<8x128xf32>
    %25 = arith.addf %17, %24 : vector<8x128xf32>
    %c126_i32 = arith.constant 126 : i32
    %26 = tpu.dynamic_rotate %1 by %c126_i32 dim 1 : vector<8x128xf32>, i32 -> vector<8x128xf32>
    %27 = arith.select %6, %26, %16 : vector<8x128xi1>, vector<8x128xf32>
    %c2_i32_4 = arith.constant 2 : i32
    %28 = tpu.dynamic_rotate %1 by %c2_i32_4 dim 1 : vector<8x128xf32>, i32 -> vector<8x128xf32>
    %29 = arith.select %10, %28, %13 : vector<8x128xi1>, vector<8x128xf32>
    %30 = arith.subf %27, %29 : vector<8x128xf32>
    %cst_5 = arith.constant 2.000000e+00 : f32
    %31 = vector.broadcast %cst_5 : f32 to vector<8x128xf32>
    %32 = arith.mulf %31, %30 : vector<8x128xf32>
    %33 = arith.addf %25, %32 : vector<8x128xf32>
    %cst_6 = arith.constant 1.000000e-01 : f32
    %34 = vector.broadcast %cst_6 : f32 to vector<8x128xf32>
    %35 = arith.mulf %33, %34 : vector<8x128xf32>
    %36 = vector.extract_strided_slice %35 {offsets = [0, 0], sizes = [8, 1], strides = [1, 1]} : vector<8x128xf32> to vector<8x1xf32>
    %37 = vector.shape_cast %36 : vector<8x1xf32> to vector<8x1xf32>
    %38 = vector.broadcast %37 : vector<8x1xf32> to vector<8x128xf32>
    %39 = vector.extract_strided_slice %35 {offsets = [0, 49], sizes = [8, 1], strides = [1, 1]} : vector<8x128xf32> to vector<8x1xf32>
    %40 = vector.shape_cast %39 : vector<8x1xf32> to vector<8x1xf32>
    %41 = vector.broadcast %40 : vector<8x1xf32> to vector<8x128xf32>
    %cst_7 = arith.constant 0.000000e+00 : f32
    %42 = vector.broadcast %cst_7 : f32 to vector<8x128xf32>
    %c127_i32_8 = arith.constant 127 : i32
    %43 = tpu.dynamic_rotate %35 by %c127_i32_8 dim 1 : vector<8x128xf32>, i32 -> vector<8x128xf32>
    %44 = arith.select %4, %43, %41 : vector<8x128xi1>, vector<8x128xf32>
    %c1_i32_9 = arith.constant 1 : i32
    %45 = tpu.dynamic_rotate %35 by %c1_i32_9 dim 1 : vector<8x128xf32>, i32 -> vector<8x128xf32>
    %46 = arith.select %8, %45, %38 : vector<8x128xi1>, vector<8x128xf32>
    %47 = arith.subf %44, %46 : vector<8x128xf32>
    %cst_10 = arith.constant 1.000000e+00 : f32
    %48 = vector.broadcast %cst_10 : f32 to vector<8x128xf32>
    %49 = arith.mulf %48, %47 : vector<8x128xf32>
    %50 = arith.addf %42, %49 : vector<8x128xf32>
    %c126_i32_11 = arith.constant 126 : i32
    %51 = tpu.dynamic_rotate %35 by %c126_i32_11 dim 1 : vector<8x128xf32>, i32 -> vector<8x128xf32>
    %52 = arith.select %6, %51, %41 : vector<8x128xi1>, vector<8x128xf32>
    %c2_i32_12 = arith.constant 2 : i32
    %53 = tpu.dynamic_rotate %35 by %c2_i32_12 dim 1 : vector<8x128xf32>, i32 -> vector<8x128xf32>
    %54 = arith.select %10, %53, %38 : vector<8x128xi1>, vector<8x128xf32>
    %55 = arith.subf %52, %54 : vector<8x128xf32>
    %cst_13 = arith.constant 2.000000e+00 : f32
    %56 = vector.broadcast %cst_13 : f32 to vector<8x128xf32>
    %57 = arith.mulf %56, %55 : vector<8x128xf32>
    %58 = arith.addf %50, %57 : vector<8x128xf32>
    %cst_14 = arith.constant 1.000000e-01 : f32
    %59 = vector.broadcast %cst_14 : f32 to vector<8x128xf32>
    %60 = arith.mulf %58, %59 : vector<8x128xf32>
    %61 = vector.extract_strided_slice %1 {offsets = [0, 0], sizes = [8, 50], strides = [1, 1]} : vector<8x128xf32> to vector<8x50xf32>
    %c0_15 = arith.constant 0 : index
    %c0_16 = arith.constant 0 : index
    %c0_17 = arith.constant 0 : index
    %c0_18 = arith.constant 0 : index
    %62 = vector.load %arg3[%c0_15, %c0_16, %c0_17, %c0_18] : memref<1x3x8x50xf32, #tpu.memory_space<vmem>>, vector<1x1x8x50xf32>
    %63 = vector.shape_cast %62 : vector<1x1x8x50xf32> to vector<8x50xf32>
    %64 = vector.shape_cast %61 : vector<8x50xf32> to vector<1x1x8x50xf32>
    tpu.vector_store %arg3[%c0_15, %c0_16, %c0_17, %c0_18], %64 {strides = array<i32>} : memref<1x3x8x50xf32, #tpu.memory_space<vmem>>, vector<1x1x8x50xf32>,
    %65 = vector.extract_strided_slice %35 {offsets = [0, 0], sizes = [8, 50], strides = [1, 1]} : vector<8x128xf32> to vector<8x50xf32>
    %c0_19 = arith.constant 0 : index
    %c1 = arith.constant 1 : index
    %c0_20 = arith.constant 0 : index
    %c0_21 = arith.constant 0 : index
    %66 = vector.load %arg3[%c0_19, %c1, %c0_20, %c0_21] : memref<1x3x8x50xf32, #tpu.memory_space<vmem>>, vector<1x1x8x50xf32>
    %67 = vector.shape_cast %66 : vector<1x1x8x50xf32> to vector<8x50xf32>
    %68 = vector.shape_cast %65 : vector<8x50xf32> to vector<1x1x8x50xf32>
    tpu.vector_store %arg3[%c0_19, %c1, %c0_20, %c0_21], %68 {strides = array<i32>} : memref<1x3x8x50xf32, #tpu.memory_space<vmem>>, vector<1x1x8x50xf32>,
    %69 = vector.extract_strided_slice %60 {offsets = [0, 0], sizes = [8, 50], strides = [1, 1]} : vector<8x128xf32> to vector<8x50xf32>
    %c0_22 = arith.constant 0 : index
    %c2 = arith.constant 2 : index
    %c0_23 = arith.constant 0 : index
    %c0_24 = arith.constant 0 : index
    %70 = vector.load %arg3[%c0_22, %c2, %c0_23, %c0_24] : memref<1x3x8x50xf32, #tpu.memory_space<vmem>>, vector<1x1x8x50xf32>
    %71 = vector.shape_cast %70 : vector<1x1x8x50xf32> to vector<8x50xf32>
    %72 = vector.shape_cast %69 : vector<8x50xf32> to vector<1x1x8x50xf32>
    tpu.vector_store %arg3[%c0_22, %c2, %c0_23, %c0_24], %72 {strides = array<i32>} : memref<1x3x8x50xf32, #tpu.memory_space<vmem>>, vector<1x1x8x50xf32>,
    return
  }
  func.func @transform_0(%arg0: i32, %arg1: i32) -> (i32, i32, i32) {
    %c0_i32 = arith.constant 0 : i32
    %c0_i32_0 = arith.constant 0 : i32
    return %arg0, %arg1, %c0_i32 : i32, i32, i32
  }
  func.func @transform_1(%arg0: i32, %arg1: i32) -> (i32, i32, i32, i32) {
    %c0_i32 = arith.constant 0 : i32
    %c0_i32_0 = arith.constant 0 : i32
    %c0_i32_1 = arith.constant 0 : i32
    return %arg0, %c0_i32, %arg1, %c0_i32_0 : i32, i32, i32, i32
  }
}

</mosaic_0001>

<llo_original>
// kernel: tpu_custom_call.1
$region0: #{tpu_custom_call.1}
  #allocation0 [shape = 'u32[]', space=smem, size = 0x4, offset = 0x4, fixed_abs, tag = 'smem constant byte address 0x4 - core index']
  #allocation1 [shape = 'u32[144,128]{1,0:T(1,128)}', space=vmem, size = 0x12000, scoped, tag = 'internal scratch']
  %s0 = inlined_call_operand.hbm [shape: f32[2,16,50], index: 0, kind: input, shape index: {}]
  %s1 = inlined_call_operand.hbm [shape: f32[2,3,16,50], index: 1, kind: output, shape index: {}]
  %s2 = sld [smem:[#allocation0]]
  $region41: #{tpu_custom_call.1} parent=0
    _
  %s4 = ssub.s32 1, %s2
  %s5 = scalar_select 0, %s4, %s2
  $region1: #{tpu_custom_call.1} parent=0
    #allocation2 [shape = 'u8[8192]{0}', space=vmem, size = 0x2000, scoped, tag = 'input window, operand 0']
    #allocation3 [shape = 's32[2]{0}', space=sflag, size = 0x8, scoped, tag = 'scoped memory for tpu_custom_call.1']
    #allocation4 [shape = 's32[2]{0}', space=sflag, size = 0x8, scoped, tag = 'scoped memory for tpu_custom_call.1']
    #allocation5 [shape = 'u8[24576]{0}', space=vmem, size = 0x6000, scoped, tag = 'output window, operand 0']
    %6 = vsyncpa [#allocation3], 0
    %s7 = scalar_lea.sflag [#allocation3], 1
    %8 = vsyncpa %s7, 0
    %9 = vsyncpa [#allocation4], 0
    %s10 = scalar_lea.sflag [#allocation4], 1
    %11 = vsyncpa %s10, 0
    loop: start=0, step=1, limit=6
    $region2: #{tpu_custom_call.1} parent=1 // loop_pre_header
      _
    $region3: #{tpu_custom_call.1} parent=1 // loop_header
      %s13 = sphi 0, %s17
      %p14 = scmp.ge.s32.totalorder %s13, 6
      %s20 = sphi 0, %s32
      %s21 = sphi 0, %s28
      %s22 = sphi 0, %s20
      %s23 = sphi 0, %s21
      %s24 = sphi 0, %s22
      %s25 = sphi 0, %s23
      %s37 = sphi 0, %s39
      %s40 = sphi 0, %s37
      %s41 = sphi 0, %s40
      %s57 = sphi 0, %s41
      %s65 = sphi 0, %s67
      %s68 = sphi 0, %s65
      %s69 = sphi 0, %s68
      %s85 = sphi 0, %s69
    $region4: #{tpu_custom_call.1} parent=1 // loop_header_branch
      %16 = sbr.rel (%p14) target = $region8
    $region5: #{tpu_custom_call.1} parent=1 // loop_body
      %s18 = ssub.s32 %s13, 1
      %s19 = ssub.s32 %s13, 2
      %s26 = sadd.s32 1, %s21
      %p27 = scmp.ge.s32.totalorder %s26, 2
      %s28 = scalar_select %p27, 0, %s26
      %s29 = sadd.s32 1, %s20
      %s30 = scalar_select %p27, %s29, %s20
      %p31 = scmp.ge.s32.totalorder %s30, 2
      %s32 = scalar_select %p31, 0, %s30
      %s33 = ssub.s32 %s20, %s32
      %s34 = ssub.s32 %s21, %s28
      %s35 = sor.u32 %s33, %s34
      %p36 = scmp.eq.s32.totalorder %s35, 0
      %s38 = sadd.s32 %s37, 1
      %s39 = scalar_select %p36, %s37, %s38
      %p42 = pneg %p36
      %p43 = scmp.eq.s32.totalorder %s13, 3
      %p44 = por %p42, %p43
      %p45 = scmp.ne.s32.totalorder %s37, %s40
      %p46 = scmp.eq.s32.totalorder %s13, 0
      %p47 = por %p45, %p46
      %p48 = scmp.ne.s32.totalorder %s37, %s40
      %p49 = scmp.eq.s32.totalorder %s18, 3
      %p50 = por %p48, %p49
      %p51 = scmp.ne.s32.totalorder %s40, %s41
      %p52 = scmp.eq.s32.totalorder %s18, 0
      %p53 = por %p51, %p52
      %p54 = scmp.ne.s32.totalorder %s40, %s41
      %p55 = scmp.eq.s32.totalorder %s19, 3
      %p56 = por %p54, %p55
      %p58 = scmp.ne.s32.totalorder %s41, %s57
      %p59 = scmp.eq.s32.totalorder %s19, 0
      %p60 = por %p58, %p59
      %s61 = ssub.s32 %s20, %s32
      %s62 = ssub.s32 %s21, %s28
      %s63 = sor.u32 %s61, %s62
      %p64 = scmp.eq.s32.totalorder %s63, 0
      %s66 = sadd.s32 %s65, 1
      %s67 = scalar_select %p64, %s65, %s66
      %p70 = pneg %p64
      %p71 = scmp.eq.s32.totalorder %s13, 3
      %p72 = por %p70, %p71
      %p73 = scmp.ne.s32.totalorder %s65, %s68
      %p74 = scmp.eq.s32.totalorder %s13, 0
      %p75 = por %p73, %p74
      %p76 = scmp.ne.s32.totalorder %s65, %s68
      %p77 = scmp.eq.s32.totalorder %s18, 3
      %p78 = por %p76, %p77
      %p79 = scmp.ne.s32.totalorder %s68, %s69
      %p80 = scmp.eq.s32.totalorder %s18, 0
      %p81 = por %p79, %p80
      %p82 = scmp.ne.s32.totalorder %s68, %s69
      %p83 = scmp.eq.s32.totalorder %s19, 3
      %p84 = por %p82, %p83
      %p86 = scmp.ne.s32.totalorder %s69, %s85
      %p87 = scmp.eq.s32.totalorder %s19, 0
      %p88 = por %p86, %p87
      %p89 = scmp.le.s32.totalorder 1, %s13
      %p90 = scmp.lt.s32.totalorder %s13, 5
      %p91 = pnand %p89, %p90
      %p92 = pneg %p91
      // Predicated region
      $region9: #{tpu_custom_call.1} parent=5 // pred_check
        _
      $region10: #{tpu_custom_call.1} parent=5 // pred_check_branch
        %94 = sbr.rel (%p91) target = $region12
      $region11: #{tpu_custom_call.1} parent=5 // pred_region
        %s95 = ssub.s32 %s13, 1
      $region12: #{tpu_custom_call.1} parent=5 // pred_fallthru
        _
      %p96 = scmp.lt.s32.totalorder %s13, 4
      // Predicated region
      $region13: #{tpu_custom_call.1} parent=5 // pred_check
        %p97 = pneg %p96
      $region14: #{tpu_custom_call.1} parent=5 // pred_check_branch
        %99 = sbr.rel (%p97) target = $region16
      $region15: #{tpu_custom_call.1} parent=5 // pred_region
        // Predicated region
        $region17: #{tpu_custom_call.1} parent=15 // pred_check
          %p100 = pneg %p47
        $region18: #{tpu_custom_call.1} parent=15 // pred_check_branch
          %102 = sbr.rel (%p100) target = $region20
        $region19: #{tpu_custom_call.1} parent=15 // pred_region
          %s103 = sand.u32 %s37, 1
          %s104 = scalar_lea.sflag [#allocation3], %s103
          %s105 = sand.u32 %s37, 1
          %s106 = smul.addr %s105, 8
          %s107 = scalar_lea.vmem [#allocation2], %s106
          %s109 = ssub.s32 128, 128
          %110 = vsyncadd %s104, %s109
          %s111 = smul.addr %s20, 2
          %s112 = sadd.s32 %s21, %s111
          %s113 = smul.addr %s112, 128
          %s114 = scalar_lea.hbm %s0, %s113
          %s116 = sshll.u32 %s107, 4
          %s117 = int_to_ptr.vmem [resolvable:$true] %s116
          %119 = dma.hbm_to_vmem [thread:$0]  %s114, 128, %s117, %s104
        $region20: #{tpu_custom_call.1} parent=15 // pred_fallthru
          _
      $region16: #{tpu_custom_call.1} parent=5 // pred_fallthru
        _
      %p120 = scmp.le.s32.totalorder 1, %s13
      %p121 = scmp.lt.s32.totalorder %s13, 5
      %p122 = pnand %p120, %p121
      %p123 = pneg %p122
      // Predicated region
      $region21: #{tpu_custom_call.1} parent=5 // pred_check
        _
      $region22: #{tpu_custom_call.1} parent=5 // pred_check_branch
        %125 = sbr.rel (%p122) target = $region24
      $region23: #{tpu_custom_call.1} parent=5 // pred_region
        %s126 = ssub.s32 %s13, 1
        %s127 = sand.u32 %s40, 1
        %s128 = scalar_lea.sflag [#allocation3], %s127
        %s129 = sand.u32 %s40, 1
        %s130 = smul.addr %s129, 8
        %s131 = scalar_lea.vmem [#allocation2], %s130
        // Predicated region
        $region25: #{tpu_custom_call.1} parent=23 // pred_check
          %p132 = pneg %p53
        $region26: #{tpu_custom_call.1} parent=23 // pred_check_branch
          %134 = sbr.rel (%p132) target = $region28
        $region27: #{tpu_custom_call.1} parent=23 // pred_region
          %135 = dma.done %s128, 128
        $region28: #{tpu_custom_call.1} parent=23 // pred_fallthru
          _
        %s136 = sand.u32 %s40, 1
        %s137 = scalar_lea.sflag [#allocation3], %s136
        %s138 = sand.u32 %s40, 1
        %s139 = smul.addr %s138, 8
        %s140 = scalar_lea.vmem [#allocation2], %s139
        %p141 = pneg %p53
        %p142 = pneg %p50
        %p143 = pneg %p81
        %p144 = pneg %p78
        %s145 = sand.u32 %s68, 1
        %s146 = scalar_lea.sflag [#allocation4], %s145
        %s147 = sand.u32 %s68, 1
        %s148 = smul.addr %s147, 24
        %s149 = scalar_lea.vmem [#allocation5], %s148
        %v150 = vld [vmem:[%s131] sm:$0xff]
        %v151 = vlaneseq
        %v152 = vand.u32 %v151, 127
        %vm153 = vcmp.lt.s32.totalorder %v152, 49
        %vm154 = vcmp.lt.s32.totalorder %v152, 48
        %vm155 = vcmp.ge.s32.totalorder %v152, 1
        %vm156 = vcmp.ge.s32.totalorder %v152, 2
        %158 = vset.pattern.permute.xlu0 0
        %159 = vperm.xlu0 %158, %v150
        %v160 = vpop.permute.xlu0 %159
        %162 = vset.pattern.permute.xlu0 49
        %163 = vperm.xlu0 %162, %v150
        %v164 = vpop.permute.xlu0 %163
        %166 = vrot.lane.b32.xlu0 %v150, 127
        %v167 = vpop.permute.xlu0 %166
        %v168 = vsel %vm153, %v167, %v164
        %169 = vrot.lane.b32.xlu0 %v150, 1
        %v170 = vpop.permute.xlu0 %169
        %v171 = vsel %vm155, %v170, %v160
        %v172 = vsub.f32 %v168, %v171
        %v173 = vadd.f32 %v172, 0.0
        %174 = vrot.lane.b32.xlu0 %v150, 126
        %v175 = vpop.permute.xlu0 %174
        %v176 = vsel %vm154, %v175, %v164
        %177 = vrot.lane.b32.xlu0 %v150, 2
        %v178 = vpop.permute.xlu0 %177
        %v179 = vsel %vm156, %v178, %v160
        %v180 = vsub.f32 %v176, %v179
        %v181 = vmul.f32 %v180, 2.0
        %v182 = vadd.f32 %v173, %v181
        %v183 = vmul.f32 %v182, 0.1
        %185 = vset.pattern.permute.xlu0 0
        %186 = vperm.xlu0 %185, %v183
        %v187 = vpop.permute.xlu0 %186
        %189 = vset.pattern.permute.xlu0 49
        %190 = vperm.xlu0 %189, %v183
        %v191 = vpop.permute.xlu0 %190
        %193 = vrot.lane.b32.xlu0 %v183, 127
        %v194 = vpop.permute.xlu0 %193
        %v195 = vsel %vm153, %v194, %v191
        %196 = vrot.lane.b32.xlu0 %v183, 1
        %v197 = vpop.permute.xlu0 %196
        %v198 = vsel %vm155, %v197, %v187
        %v199 = vsub.f32 %v195, %v198
        %v200 = vadd.f32 %v199, 0.0
        %201 = vrot.lane.b32.xlu0 %v183, 126
        %v202 = vpop.permute.xlu0 %201
        %v203 = vsel %vm154, %v202, %v191
        %204 = vrot.lane.b32.xlu0 %v183, 2
        %v205 = vpop.permute.xlu0 %204
        %v206 = vsel %vm156, %v205, %v187
        %v207 = vsub.f32 %v203, %v206
        %v208 = vmul.f32 %v207, 2.0
        %v209 = vadd.f32 %v200, %v208
        %v210 = vmul.f32 %v209, 0.1
        %vm211 = vcmask 408576
        %212 = vst.msk [vmem:[%s149] sm:$0xff] %vm211, %v150
        %s213 = scalar_lea.vmem %s149, 8 [#allocation5]
        %214 = vst.msk [vmem:[%s213] sm:$0xff] %vm211, %v183
        %s215 = scalar_lea.vmem %s149, 16 [#allocation5]
        %216 = vst.msk [vmem:[%s215] sm:$0xff] %vm211, %v210
        %s217 = sand.u32 %s68, 1
        %s218 = scalar_lea.sflag [#allocation4], %s217
        %s219 = sand.u32 %s68, 1
        %s220 = smul.addr %s219, 24
        %s221 = scalar_lea.vmem [#allocation5], %s220
        // Predicated region
        $region29: #{tpu_custom_call.1} parent=23 // pred_check
          %p222 = pneg %p78
        $region30: #{tpu_custom_call.1} parent=23 // pred_check_branch
          %224 = sbr.rel (%p222) target = $region32
        $region31: #{tpu_custom_call.1} parent=23 // pred_region
          %s226 = ssub.s32 384, 384
          %227 = vsyncadd %s218, %s226
          %s228 = smul.addr %s22, 6
          %s229 = sadd.s32 %s23, %s228
          %s230 = smul.addr %s229, 128
          %s231 = scalar_lea.hbm %s1, %s230
          %s232 = sshll.u32 %s221, 4
          %s233 = int_to_ptr.vmem [resolvable:$true] %s232
          %238 = dma.vmem_to_hbm [thread:$0]  %s233, 384, %s231, %s218, 128, 256, 8
        $region32: #{tpu_custom_call.1} parent=23 // pred_fallthru
          _
      $region24: #{tpu_custom_call.1} parent=5 // pred_fallthru
        _
      %p239 = scmp.le.s32.totalorder 2, %s13
      // Predicated region
      $region33: #{tpu_custom_call.1} parent=5 // pred_check
        %p240 = pneg %p239
      $region34: #{tpu_custom_call.1} parent=5 // pred_check_branch
        %242 = sbr.rel (%p240) target = $region36
      $region35: #{tpu_custom_call.1} parent=5 // pred_region
        %s243 = ssub.s32 %s13, 2
        // Predicated region
        $region37: #{tpu_custom_call.1} parent=35 // pred_check
          %p244 = pneg %p84
        $region38: #{tpu_custom_call.1} parent=35 // pred_check_branch
          %246 = sbr.rel (%p244) target = $region40
        $region39: #{tpu_custom_call.1} parent=35 // pred_region
          %s247 = sand.u32 %s69, 1
          %s248 = scalar_lea.sflag [#allocation4], %s247
          %s249 = sand.u32 %s69, 1
          %s250 = smul.addr %s249, 24
          %s251 = scalar_lea.vmem [#allocation5], %s250
          %252 = dma.done %s248, 384
        $region40: #{tpu_custom_call.1} parent=35 // pred_fallthru
          _
      $region36: #{tpu_custom_call.1} parent=5 // pred_fallthru
        _
    $region6: #{tpu_custom_call.1} parent=1 // loop_footer
      %s17 = sadd.s32 1, %s13
    $region7: #{tpu_custom_call.1} parent=1 // loop_footer_branch
      %12 = sbr.rel target = $region3
    $region8: #{tpu_custom_call.1} parent=1 // loop_exit
      _
    %253 = vsyncpa [#allocation3], 1
    %s254 = scalar_lea.sflag [#allocation3], 1
    %255 = vsyncpa %s254, 1
    %256 = vsyncpa [#allocation4], 1
    %s257 = scalar_lea.sflag [#allocation4], 1
    %258 = vsyncpa %s257, 1

</llo_original>
